<compile_context>
chip_gen: v6e
topology: v6e:2x2x1
jax: 0.10.0
libtpu: 0.0.40
codegen_flags: <defaults>
</compile_context>

<pallas_src>
import functools

import jax
import jax.numpy as jnp
from jax import lax
from jax.experimental import pallas as pl
from jax.experimental.pallas import tpu as pltpu


def _round_up(x, m):
    return (x + m - 1) // m * m


def _rbm_kernel(v_ref, w_ref, wt_ref, vb_ref, hb_ref, rh_ref, rv_ref,
                vout_ref, *, k, compute_dtype):
    """Full k-step Gibbs chain for one batch tile, entirely in VMEM.

    v_ref    : (TB, Vp)       f32            visible units (batch tile)
    w_ref    : (Hp, Vp)       compute_dtype  W     (used for h @ W)
    wt_ref   : (Vp, Hp)       compute_dtype  W^T   (used for v @ W^T, pre-transposed on host)
    vb_ref   : (1, Vp)        f32            visible bias
    hb_ref   : (1, Hp)        f32            hidden bias
    rh_ref   : (k+1, TB, Hp)  f32            uniforms for hidden-unit sampling
    rv_ref   : (k,   TB, Vp)  f32            uniforms for visible-unit sampling
    vout_ref : (TB, Vp)       f32            v_ after k Gibbs steps
    """
    TB, Vp = v_ref.shape
    Hp = w_ref.shape[0]

    W = w_ref[...]
    WT = wt_ref[...]
    # Hoist bias broadcasts out of the Gibbs loop (JAX does not CSE
    # broadcast_in_dim; inside the loop it would be re-materialized 2k+1 times).
    hb_b = jnp.broadcast_to(hb_ref[...], (TB, Hp))
    vb_b = jnp.broadcast_to(vb_ref[...], (TB, Vp))

    def sample(p, u):
        # F.relu(torch.sign(p - u)) == 1.0 where p > u else 0.0.  Values are
        # exactly {0,1}, so producing them directly in the MXU operand dtype
        # (bf16) is lossless.
        return (p > u).astype(compute_dtype)

    def v_to_h(vv, u):
        # F.linear(v, W, h_bias) = v @ W^T + h_bias   (NN matmul, W^T precomputed)
        logits = jnp.dot(vv, WT, preferred_element_type=jnp.float32) + hb_b
        return sample(jax.nn.sigmoid(logits), u)

    def h_to_v(hh, u):
        # F.linear(h, W^T, v_bias) = h @ W + v_bias
        logits = jnp.dot(hh, W, preferred_element_type=jnp.float32) + vb_b
        return sample(jax.nn.sigmoid(logits), u)

    h0 = v_to_h(v_ref[...].astype(compute_dtype), rh_ref[0])

    def body(i, carry):
        h_, _ = carry
        v_ = h_to_v(h_, rv_ref[i])
        h_ = v_to_h(v_, rh_ref[i + 1])
        return h_, v_

    _, v_k = lax.fori_loop(
        0, k, body, (h0, jnp.zeros((TB, Vp), compute_dtype)), unroll=True)

    vout_ref[...] = v_k.astype(vout_ref.dtype)   # {0,1} -> exact in f32


def rbm_forward(v, W, v_bias, h_bias, *, k=5, seed=0, batch_tile=128,
                use_bf16=True):
    """Returns (v, v_) exactly like RBM.forward (v_ sampled after k Gibbs steps)."""
    assert k >= 1, "RBM.forward with k=0 would leave v_ undefined in the reference"
    B, V = v.shape
    H = W.shape[0]
    assert W.shape == (H, V)

    f32 = jnp.float32
    compute_dtype = jnp.bfloat16 if use_bf16 else f32

    # Lane-pad H, V to multiples of 128; sublane-pad / tile the batch.
    Vp = _round_up(V, 128)
    Hp = _round_up(H, 128)
    TB = min(_round_up(B, 8), batch_tile)
    Bp = _round_up(B, TB)

    W_pad = jnp.zeros((Hp, Vp), f32).at[:H, :V].set(W.astype(f32))
    WT_pad = W_pad.T                                   # pre-transposed once on host
    vb_pad = jnp.zeros((1, Vp), f32).at[0, :V].set(v_bias.astype(f32).reshape(V))
    hb_pad = jnp.zeros((1, Hp), f32).at[0, :H].set(h_bias.astype(f32).reshape(H))
    v_pad = jnp.zeros((Bp, Vp), f32).at[:B, :V].set(v.astype(f32))

    # torch.rand(...) of every sampling step, precomputed on the host.
    # Padded units draw uniforms too, but their rows/cols of W are zero so they
    # never influence real units; padded output columns are sliced away below.
    kh, kv = jax.random.split(jax.random.PRNGKey(seed))
    rand_h = jax.random.uniform(kh, (k + 1, Bp, Hp), dtype=f32)
    rand_v = jax.random.uniform(kv, (k, Bp, Vp), dtype=f32)

    kernel = functools.partial(_rbm_kernel, k=k, compute_dtype=compute_dtype)

    v_out = pl.pallas_call(
        kernel,
        out_shape=jax.ShapeDtypeStruct((Bp, Vp), f32),
        grid=(Bp // TB,),
        in_specs=[
            pl.BlockSpec((TB, Vp), lambda b: (b, 0)),             # v (batch tile)
            pl.BlockSpec((Hp, Vp), lambda b: (0, 0)),             # W
            pl.BlockSpec((Vp, Hp), lambda b: (0, 0)),             # W^T
            pl.BlockSpec((1, Vp), lambda b: (0, 0)),              # v_bias
            pl.BlockSpec((1, Hp), lambda b: (0, 0)),              # h_bias
            pl.BlockSpec((k + 1, TB, Hp), lambda b: (0, b, 0)),   # uniforms (hidden)
            pl.BlockSpec((k, TB, Vp), lambda b: (0, b, 0)),       # uniforms (visible)
        ],
        out_specs=pl.BlockSpec((TB, Vp), lambda b: (b, 0)),
        compiler_params=pltpu.CompilerParams(
            dimension_semantics=("parallel",),        # megacore-shard batch tiles
            vmem_limit_bytes=48 * 1024 * 1024,        # headroom for real RBM sizes
        ),
    )(v_pad,
      W_pad.astype(compute_dtype),
      WT_pad.astype(compute_dtype),
      vb_pad, hb_pad, rand_h, rand_v)

    return v, v_out[:B, :V]


if __name__ == "__main__":
    # Small shapes consistent with the module (n_vis=784, n_hin=500 scaled down).
    B, n_vis, n_hin, k = 8, 256, 128, 5

    key = jax.random.PRNGKey(0)
    k_w, k_v = jax.random.split(key)

    # Deterministic parameter init matching the module's __init__ recipe:
    #   W = randn(n_hin, n_vis) * 0.01, v_bias = 0, h_bias = 0
    W = jax.random.normal(k_w, (n_hin, n_vis), dtype=jnp.float32) * 0.01
    v_bias = jnp.zeros((n_vis,), dtype=jnp.float32)
    h_bias = jnp.zeros((n_hin,), dtype=jnp.float32)

    # Binary-ish visible input (like MNIST pixels thresholded).
    v = (jax.random.uniform(k_v, (B, n_vis)) > 0.5).astype(jnp.float32)

    v_in, v_k = rbm_forward(v, W, v_bias, h_bias, k=k, seed=0)
    jax.block_until_ready((v_in, v_k))

    assert v_in.shape == (B, n_vis) and v_k.shape == (B, n_vis)
    assert v_k.dtype == jnp.float32
    # Samples must be exactly {0, 1}.
    assert bool(jnp.all((v_k == 0.0) | (v_k == 1.0)))

    print("KERNEL_OK")
</pallas_src>

<mosaic_0001>
module attributes {stable_mosaic.version = 11 : i64} {
  func.func @_rbm_kernel(%arg0: i32, %arg1: memref<8x256xf32, #tpu.memory_space<vmem>>, %arg2: memref<128x256xbf16, #tpu.memory_space<vmem>>, %arg3: memref<256x128xbf16, #tpu.memory_space<vmem>>, %arg4: memref<1x256xf32, #tpu.memory_space<vmem>>, %arg5: memref<1x128xf32, #tpu.memory_space<vmem>>, %arg6: memref<6x8x128xf32, #tpu.memory_space<vmem>>, %arg7: memref<5x8x256xf32, #tpu.memory_space<vmem>>, %arg8: memref<8x256xf32, #tpu.memory_space<vmem>>) attributes {dimension_semantics = [#tpu.dimension_semantics<parallel>], iteration_bounds = array<i64: 1>, scalar_prefetch = 0 : i64, scratch_operands = 0 : i64, tpu.core_type = #tpu.core_type<tc>, window_params = [{transform_indices = @transform_0, window_bounds = array<i64: 8, 256>}, {pipeline_mode = #tpu.pipeline_mode<synchronous>, transform_indices = @transform_1, window_bounds = array<i64: 128, 256>}, {pipeline_mode = #tpu.pipeline_mode<synchronous>, transform_indices = @transform_2, window_bounds = array<i64: 256, 128>}, {pipeline_mode = #tpu.pipeline_mode<synchronous>, transform_indices = @transform_3, window_bounds = array<i64: 1, 256>}, {pipeline_mode = #tpu.pipeline_mode<synchronous>, transform_indices = @transform_4, window_bounds = array<i64: 1, 128>}, {transform_indices = @transform_5, window_bounds = array<i64: 6, 8, 128>}, {transform_indices = @transform_6, window_bounds = array<i64: 5, 8, 256>}, {transform_indices = @transform_7, window_bounds = array<i64: 8, 256>}]} {
    %c0 = arith.constant 0 : index
    %c0_0 = arith.constant 0 : index
    %0 = vector.load %arg2[%c0, %c0_0] : memref<128x256xbf16, #tpu.memory_space<vmem>>, vector<128x256xbf16>
    %c0_1 = arith.constant 0 : index
    %c0_2 = arith.constant 0 : index
    %1 = vector.load %arg3[%c0_1, %c0_2] : memref<256x128xbf16, #tpu.memory_space<vmem>>, vector<256x128xbf16>
    %c0_3 = arith.constant 0 : index
    %c0_4 = arith.constant 0 : index
    %2 = vector.load %arg5[%c0_3, %c0_4] : memref<1x128xf32, #tpu.memory_space<vmem>>, vector<1x128xf32>
    %3 = vector.shape_cast %2 : vector<1x128xf32> to vector<1x128xf32>
    %4 = vector.broadcast %3 : vector<1x128xf32> to vector<8x128xf32>
    %c0_5 = arith.constant 0 : index
    %c0_6 = arith.constant 0 : index
    %5 = vector.load %arg4[%c0_5, %c0_6] : memref<1x256xf32, #tpu.memory_space<vmem>>, vector<1x256xf32>
    %6 = vector.shape_cast %5 : vector<1x256xf32> to vector<1x256xf32>
    %7 = vector.broadcast %6 : vector<1x256xf32> to vector<8x256xf32>
    %c0_7 = arith.constant 0 : index
    %c0_8 = arith.constant 0 : index
    %8 = vector.load %arg1[%c0_7, %c0_8] : memref<8x256xf32, #tpu.memory_space<vmem>>, vector<8x256xf32>
    %9 = arith.truncf %8 : vector<8x256xf32> to vector<8x256xbf16>
    %c0_9 = arith.constant 0 : index
    %c0_10 = arith.constant 0 : index
    %c0_11 = arith.constant 0 : index
    %10 = vector.load %arg6[%c0_9, %c0_10, %c0_11] : memref<6x8x128xf32, #tpu.memory_space<vmem>>, vector<1x8x128xf32>
    %11 = vector.shape_cast %10 : vector<1x8x128xf32> to vector<8x128xf32>
    %cst = arith.constant dense<0.000000e+00> : vector<8x128xf32>
    %12 = tpu.matmul %9, %1, %cst {dimension_numbers = #tpu.dot_dimension_numbers<[1], [0], [0], [1], [0, 0, 1, 1], [], []>} : vector<8x256xbf16>, vector<256x128xbf16>, vector<8x128xf32> -> vector<8x128xf32>
    %13 = arith.addf %12, %4 : vector<8x128xf32>
    %14 = arith.negf %13 : vector<8x128xf32>
    %15 = math.exp %14 : vector<8x128xf32>
    %cst_12 = arith.constant 1.000000e+00 : f32
    %16 = vector.broadcast %cst_12 : f32 to vector<8x128xf32>
    %17 = arith.addf %16, %15 : vector<8x128xf32>
    %18 = arith.divf %16, %17 : vector<8x128xf32>
    %19 = arith.cmpf ogt, %18, %11 : vector<8x128xf32>
    %20 = arith.extui %19 : vector<8x128xi1> to vector<8x128xi32>
    %21 = arith.sitofp %20 : vector<8x128xi32> to vector<8x128xf32>
    %22 = arith.truncf %21 : vector<8x128xf32> to vector<8x128xbf16>
    %cst_13 = arith.constant 0.000000e+00 : bf16
    %23 = vector.broadcast %cst_13 : bf16 to vector<8x256xbf16>
    %c0_i32 = arith.constant 0 : i32
    %24 = arith.index_cast %c0_i32 : i32 to index
    %c0_14 = arith.constant 0 : index
    %c0_15 = arith.constant 0 : index
    %25 = vector.load %arg7[%24, %c0_14, %c0_15] : memref<5x8x256xf32, #tpu.memory_space<vmem>>, vector<1x8x256xf32>
    %26 = vector.shape_cast %25 : vector<1x8x256xf32> to vector<8x256xf32>
    %cst_16 = arith.constant dense<0.000000e+00> : vector<8x256xf32>
    %27 = tpu.matmul %22, %0, %cst_16 {dimension_numbers = #tpu.dot_dimension_numbers<[1], [0], [0], [1], [0, 0, 1, 1], [], []>} : vector<8x128xbf16>, vector<128x256xbf16>, vector<8x256xf32> -> vector<8x256xf32>
    %28 = arith.addf %27, %7 : vector<8x256xf32>
    %29 = arith.negf %28 : vector<8x256xf32>
    %30 = math.exp %29 : vector<8x256xf32>
    %cst_17 = arith.constant 1.000000e+00 : f32
    %31 = vector.broadcast %cst_17 : f32 to vector<8x256xf32>
    %32 = arith.addf %31, %30 : vector<8x256xf32>
    %33 = arith.divf %31, %32 : vector<8x256xf32>
    %34 = arith.cmpf ogt, %33, %26 : vector<8x256xf32>
    %35 = arith.extui %34 : vector<8x256xi1> to vector<8x256xi32>
    %36 = arith.sitofp %35 : vector<8x256xi32> to vector<8x256xf32>
    %37 = arith.truncf %36 : vector<8x256xf32> to vector<8x256xbf16>
    %c1_i32 = arith.constant 1 : i32
    %38 = arith.addi %c0_i32, %c1_i32 : i32
    %39 = arith.index_cast %38 : i32 to index
    %c0_18 = arith.constant 0 : index
    %c0_19 = arith.constant 0 : index
    %40 = vector.load %arg6[%39, %c0_18, %c0_19] : memref<6x8x128xf32, #tpu.memory_space<vmem>>, vector<1x8x128xf32>
    %41 = vector.shape_cast %40 : vector<1x8x128xf32> to vector<8x128xf32>
    %cst_20 = arith.constant dense<0.000000e+00> : vector<8x128xf32>
    %42 = tpu.matmul %37, %1, %cst_20 {dimension_numbers = #tpu.dot_dimension_numbers<[1], [0], [0], [1], [0, 0, 1, 1], [], []>} : vector<8x256xbf16>, vector<256x128xbf16>, vector<8x128xf32> -> vector<8x128xf32>
    %43 = arith.addf %42, %4 : vector<8x128xf32>
    %44 = arith.negf %43 : vector<8x128xf32>
    %45 = math.exp %44 : vector<8x128xf32>
    %cst_21 = arith.constant 1.000000e+00 : f32
    %46 = vector.broadcast %cst_21 : f32 to vector<8x128xf32>
    %47 = arith.addf %46, %45 : vector<8x128xf32>
    %48 = arith.divf %46, %47 : vector<8x128xf32>
    %49 = arith.cmpf ogt, %48, %41 : vector<8x128xf32>
    %50 = arith.extui %49 : vector<8x128xi1> to vector<8x128xi32>
    %51 = arith.sitofp %50 : vector<8x128xi32> to vector<8x128xf32>
    %52 = arith.truncf %51 : vector<8x128xf32> to vector<8x128xbf16>
    %c1_i32_22 = arith.constant 1 : i32
    %53 = arith.index_cast %c1_i32_22 : i32 to index
    %c0_23 = arith.constant 0 : index
    %c0_24 = arith.constant 0 : index
    %54 = vector.load %arg7[%53, %c0_23, %c0_24] : memref<5x8x256xf32, #tpu.memory_space<vmem>>, vector<1x8x256xf32>
    %55 = vector.shape_cast %54 : vector<1x8x256xf32> to vector<8x256xf32>
    %cst_25 = arith.constant dense<0.000000e+00> : vector<8x256xf32>
    %56 = tpu.matmul %52, %0, %cst_25 {dimension_numbers = #tpu.dot_dimension_numbers<[1], [0], [0], [1], [0, 0, 1, 1], [], []>} : vector<8x128xbf16>, vector<128x256xbf16>, vector<8x256xf32> -> vector<8x256xf32>
    %57 = arith.addf %56, %7 : vector<8x256xf32>
    %58 = arith.negf %57 : vector<8x256xf32>
    %59 = math.exp %58 : vector<8x256xf32>
    %cst_26 = arith.constant 1.000000e+00 : f32
    %60 = vector.broadcast %cst_26 : f32 to vector<8x256xf32>
    %61 = arith.addf %60, %59 : vector<8x256xf32>
    %62 = arith.divf %60, %61 : vector<8x256xf32>
    %63 = arith.cmpf ogt, %62, %55 : vector<8x256xf32>
    %64 = arith.extui %63 : vector<8x256xi1> to vector<8x256xi32>
    %65 = arith.sitofp %64 : vector<8x256xi32> to vector<8x256xf32>
    %66 = arith.truncf %65 : vector<8x256xf32> to vector<8x256xbf16>
    %c1_i32_27 = arith.constant 1 : i32
    %67 = arith.addi %c1_i32_22, %c1_i32_27 : i32
    %68 = arith.index_cast %67 : i32 to index
    %c0_28 = arith.constant 0 : index
    %c0_29 = arith.constant 0 : index
    %69 = vector.load %arg6[%68, %c0_28, %c0_29] : memref<6x8x128xf32, #tpu.memory_space<vmem>>, vector<1x8x128xf32>
    %70 = vector.shape_cast %69 : vector<1x8x128xf32> to vector<8x128xf32>
    %cst_30 = arith.constant dense<0.000000e+00> : vector<8x128xf32>
    %71 = tpu.matmul %66, %1, %cst_30 {dimension_numbers = #tpu.dot_dimension_numbers<[1], [0], [0], [1], [0, 0, 1, 1], [], []>} : vector<8x256xbf16>, vector<256x128xbf16>, vector<8x128xf32> -> vector<8x128xf32>
    %72 = arith.addf %71, %4 : vector<8x128xf32>
    %73 = arith.negf %72 : vector<8x128xf32>
    %74 = math.exp %73 : vector<8x128xf32>
    %cst_31 = arith.constant 1.000000e+00 : f32
    %75 = vector.broadcast %cst_31 : f32 to vector<8x128xf32>
    %76 = arith.addf %75, %74 : vector<8x128xf32>
    %77 = arith.divf %75, %76 : vector<8x128xf32>
    %78 = arith.cmpf ogt, %77, %70 : vector<8x128xf32>
    %79 = arith.extui %78 : vector<8x128xi1> to vector<8x128xi32>
    %80 = arith.sitofp %79 : vector<8x128xi32> to vector<8x128xf32>
    %81 = arith.truncf %80 : vector<8x128xf32> to vector<8x128xbf16>
    %c2_i32 = arith.constant 2 : i32
    %82 = arith.index_cast %c2_i32 : i32 to index
    %c0_32 = arith.constant 0 : index
    %c0_33 = arith.constant 0 : index
    %83 = vector.load %arg7[%82, %c0_32, %c0_33] : memref<5x8x256xf32, #tpu.memory_space<vmem>>, vector<1x8x256xf32>
    %84 = vector.shape_cast %83 : vector<1x8x256xf32> to vector<8x256xf32>
    %cst_34 = arith.constant dense<0.000000e+00> : vector<8x256xf32>
    %85 = tpu.matmul %81, %0, %cst_34 {dimension_numbers = #tpu.dot_dimension_numbers<[1], [0], [0], [1], [0, 0, 1, 1], [], []>} : vector<8x128xbf16>, vector<128x256xbf16>, vector<8x256xf32> -> vector<8x256xf32>
    %86 = arith.addf %85, %7 : vector<8x256xf32>
    %87 = arith.negf %86 : vector<8x256xf32>
    %88 = math.exp %87 : vector<8x256xf32>
    %cst_35 = arith.constant 1.000000e+00 : f32
    %89 = vector.broadcast %cst_35 : f32 to vector<8x256xf32>
    %90 = arith.addf %89, %88 : vector<8x256xf32>
    %91 = arith.divf %89, %90 : vector<8x256xf32>
    %92 = arith.cmpf ogt, %91, %84 : vector<8x256xf32>
    %93 = arith.extui %92 : vector<8x256xi1> to vector<8x256xi32>
    %94 = arith.sitofp %93 : vector<8x256xi32> to vector<8x256xf32>
    %95 = arith.truncf %94 : vector<8x256xf32> to vector<8x256xbf16>
    %c1_i32_36 = arith.constant 1 : i32
    %96 = arith.addi %c2_i32, %c1_i32_36 : i32
    %97 = arith.index_cast %96 : i32 to index
    %c0_37 = arith.constant 0 : index
    %c0_38 = arith.constant 0 : index
    %98 = vector.load %arg6[%97, %c0_37, %c0_38] : memref<6x8x128xf32, #tpu.memory_space<vmem>>, vector<1x8x128xf32>
    %99 = vector.shape_cast %98 : vector<1x8x128xf32> to vector<8x128xf32>
    %cst_39 = arith.constant dense<0.000000e+00> : vector<8x128xf32>
    %100 = tpu.matmul %95, %1, %cst_39 {dimension_numbers = #tpu.dot_dimension_numbers<[1], [0], [0], [1], [0, 0, 1, 1], [], []>} : vector<8x256xbf16>, vector<256x128xbf16>, vector<8x128xf32> -> vector<8x128xf32>
    %101 = arith.addf %100, %4 : vector<8x128xf32>
    %102 = arith.negf %101 : vector<8x128xf32>
    %103 = math.exp %102 : vector<8x128xf32>
    %cst_40 = arith.constant 1.000000e+00 : f32
    %104 = vector.broadcast %cst_40 : f32 to vector<8x128xf32>
    %105 = arith.addf %104, %103 : vector<8x128xf32>
    %106 = arith.divf %104, %105 : vector<8x128xf32>
    %107 = arith.cmpf ogt, %106, %99 : vector<8x128xf32>
    %108 = arith.extui %107 : vector<8x128xi1> to vector<8x128xi32>
    %109 = arith.sitofp %108 : vector<8x128xi32> to vector<8x128xf32>
    %110 = arith.truncf %109 : vector<8x128xf32> to vector<8x128xbf16>
    %c3_i32 = arith.constant 3 : i32
    %111 = arith.index_cast %c3_i32 : i32 to index
    %c0_41 = arith.constant 0 : index
    %c0_42 = arith.constant 0 : index
    %112 = vector.load %arg7[%111, %c0_41, %c0_42] : memref<5x8x256xf32, #tpu.memory_space<vmem>>, vector<1x8x256xf32>
    %113 = vector.shape_cast %112 : vector<1x8x256xf32> to vector<8x256xf32>
    %cst_43 = arith.constant dense<0.000000e+00> : vector<8x256xf32>
    %114 = tpu.matmul %110, %0, %cst_43 {dimension_numbers = #tpu.dot_dimension_numbers<[1], [0], [0], [1], [0, 0, 1, 1], [], []>} : vector<8x128xbf16>, vector<128x256xbf16>, vector<8x256xf32> -> vector<8x256xf32>
    %115 = arith.addf %114, %7 : vector<8x256xf32>
    %116 = arith.negf %115 : vector<8x256xf32>
    %117 = math.exp %116 : vector<8x256xf32>
    %cst_44 = arith.constant 1.000000e+00 : f32
    %118 = vector.broadcast %cst_44 : f32 to vector<8x256xf32>
    %119 = arith.addf %118, %117 : vector<8x256xf32>
    %120 = arith.divf %118, %119 : vector<8x256xf32>
    %121 = arith.cmpf ogt, %120, %113 : vector<8x256xf32>
    %122 = arith.extui %121 : vector<8x256xi1> to vector<8x256xi32>
    %123 = arith.sitofp %122 : vector<8x256xi32> to vector<8x256xf32>
    %124 = arith.truncf %123 : vector<8x256xf32> to vector<8x256xbf16>
    %c1_i32_45 = arith.constant 1 : i32
    %125 = arith.addi %c3_i32, %c1_i32_45 : i32
    %126 = arith.index_cast %125 : i32 to index
    %c0_46 = arith.constant 0 : index
    %c0_47 = arith.constant 0 : index
    %127 = vector.load %arg6[%126, %c0_46, %c0_47] : memref<6x8x128xf32, #tpu.memory_space<vmem>>, vector<1x8x128xf32>
    %128 = vector.shape_cast %127 : vector<1x8x128xf32> to vector<8x128xf32>
    %cst_48 = arith.constant dense<0.000000e+00> : vector<8x128xf32>
    %129 = tpu.matmul %124, %1, %cst_48 {dimension_numbers = #tpu.dot_dimension_numbers<[1], [0], [0], [1], [0, 0, 1, 1], [], []>} : vector<8x256xbf16>, vector<256x128xbf16>, vector<8x128xf32> -> vector<8x128xf32>
    %130 = arith.addf %129, %4 : vector<8x128xf32>
    %131 = arith.negf %130 : vector<8x128xf32>
    %132 = math.exp %131 : vector<8x128xf32>
    %cst_49 = arith.constant 1.000000e+00 : f32
    %133 = vector.broadcast %cst_49 : f32 to vector<8x128xf32>
    %134 = arith.addf %133, %132 : vector<8x128xf32>
    %135 = arith.divf %133, %134 : vector<8x128xf32>
    %136 = arith.cmpf ogt, %135, %128 : vector<8x128xf32>
    %137 = arith.extui %136 : vector<8x128xi1> to vector<8x128xi32>
    %138 = arith.sitofp %137 : vector<8x128xi32> to vector<8x128xf32>
    %139 = arith.truncf %138 : vector<8x128xf32> to vector<8x128xbf16>
    %c4_i32 = arith.constant 4 : i32
    %140 = arith.index_cast %c4_i32 : i32 to index
    %c0_50 = arith.constant 0 : index
    %c0_51 = arith.constant 0 : index
    %141 = vector.load %arg7[%140, %c0_50, %c0_51] : memref<5x8x256xf32, #tpu.memory_space<vmem>>, vector<1x8x256xf32>
    %142 = vector.shape_cast %141 : vector<1x8x256xf32> to vector<8x256xf32>
    %cst_52 = arith.constant dense<0.000000e+00> : vector<8x256xf32>
    %143 = tpu.matmul %139, %0, %cst_52 {dimension_numbers = #tpu.dot_dimension_numbers<[1], [0], [0], [1], [0, 0, 1, 1], [], []>} : vector<8x128xbf16>, vector<128x256xbf16>, vector<8x256xf32> -> vector<8x256xf32>
    %144 = arith.addf %143, %7 : vector<8x256xf32>
    %145 = arith.negf %144 : vector<8x256xf32>
    %146 = math.exp %145 : vector<8x256xf32>
    %cst_53 = arith.constant 1.000000e+00 : f32
    %147 = vector.broadcast %cst_53 : f32 to vector<8x256xf32>
    %148 = arith.addf %147, %146 : vector<8x256xf32>
    %149 = arith.divf %147, %148 : vector<8x256xf32>
    %150 = arith.cmpf ogt, %149, %142 : vector<8x256xf32>
    %151 = arith.extui %150 : vector<8x256xi1> to vector<8x256xi32>
    %152 = arith.sitofp %151 : vector<8x256xi32> to vector<8x256xf32>
    %153 = arith.truncf %152 : vector<8x256xf32> to vector<8x256xbf16>
    %c1_i32_54 = arith.constant 1 : i32
    %154 = arith.addi %c4_i32, %c1_i32_54 : i32
    %155 = arith.index_cast %154 : i32 to index
    %c0_55 = arith.constant 0 : index
    %c0_56 = arith.constant 0 : index
    %156 = vector.load %arg6[%155, %c0_55, %c0_56] : memref<6x8x128xf32, #tpu.memory_space<vmem>>, vector<1x8x128xf32>
    %157 = vector.shape_cast %156 : vector<1x8x128xf32> to vector<8x128xf32>
    %cst_57 = arith.constant dense<0.000000e+00> : vector<8x128xf32>
    %158 = tpu.matmul %153, %1, %cst_57 {dimension_numbers = #tpu.dot_dimension_numbers<[1], [0], [0], [1], [0, 0, 1, 1], [], []>} : vector<8x256xbf16>, vector<256x128xbf16>, vector<8x128xf32> -> vector<8x128xf32>
    %159 = arith.addf %158, %4 : vector<8x128xf32>
    %160 = arith.negf %159 : vector<8x128xf32>
    %161 = math.exp %160 : vector<8x128xf32>
    %cst_58 = arith.constant 1.000000e+00 : f32
    %162 = vector.broadcast %cst_58 : f32 to vector<8x128xf32>
    %163 = arith.addf %162, %161 : vector<8x128xf32>
    %164 = arith.divf %162, %163 : vector<8x128xf32>
    %165 = arith.cmpf ogt, %164, %157 : vector<8x128xf32>
    %166 = arith.extui %165 : vector<8x128xi1> to vector<8x128xi32>
    %167 = arith.sitofp %166 : vector<8x128xi32> to vector<8x128xf32>
    %168 = arith.truncf %167 : vector<8x128xf32> to vector<8x128xbf16>
    %c5_i32 = arith.constant 5 : i32
    %169 = arith.extf %153 : vector<8x256xbf16> to vector<8x256xf32>
    %c0_59 = arith.constant 0 : index
    %c0_60 = arith.constant 0 : index
    %170 = vector.load %arg8[%c0_59, %c0_60] : memref<8x256xf32, #tpu.memory_space<vmem>>, vector<8x256xf32>
    tpu.vector_store %arg8[%c0_59, %c0_60], %169 {strides = array<i32>} : memref<8x256xf32, #tpu.memory_space<vmem>>, vector<8x256xf32>,
    return
  }
  func.func @transform_0(%arg0: i32) -> (i32, i32) {
    %c0_i32 = arith.constant 0 : i32
    %c0_i32_0 = arith.constant 0 : i32
    return %arg0, %c0_i32 : i32, i32
  }
  func.func @transform_1(%arg0: i32) -> (i32, i32) {
    %c0_i32 = arith.constant 0 : i32
    %c0_i32_0 = arith.constant 0 : i32
    %c0_i32_1 = arith.constant 0 : i32
    return %c0_i32, %c0_i32_0 : i32, i32
  }
  func.func @transform_2(%arg0: i32) -> (i32, i32) {
    %c0_i32 = arith.constant 0 : i32
    %c0_i32_0 = arith.constant 0 : i32
    %c0_i32_1 = arith.constant 0 : i32
    return %c0_i32, %c0_i32_0 : i32, i32
  }
  func.func @transform_3(%arg0: i32) -> (i32, i32) {
    %c0_i32 = arith.constant 0 : i32
    %c0_i32_0 = arith.constant 0 : i32
    %c0_i32_1 = arith.constant 0 : i32
    return %c0_i32, %c0_i32_0 : i32, i32
  }
  func.func @transform_4(%arg0: i32) -> (i32, i32) {
    %c0_i32 = arith.constant 0 : i32
    %c0_i32_0 = arith.constant 0 : i32
    %c0_i32_1 = arith.constant 0 : i32
    return %c0_i32, %c0_i32_0 : i32, i32
  }
  func.func @transform_5(%arg0: i32) -> (i32, i32, i32) {
    %c0_i32 = arith.constant 0 : i32
    %c0_i32_0 = arith.constant 0 : i32
    %c0_i32_1 = arith.constant 0 : i32
    return %c0_i32, %arg0, %c0_i32_0 : i32, i32, i32
  }
  func.func @transform_6(%arg0: i32) -> (i32, i32, i32) {
    %c0_i32 = arith.constant 0 : i32
    %c0_i32_0 = arith.constant 0 : i32
    %c0_i32_1 = arith.constant 0 : i32
    return %c0_i32, %arg0, %c0_i32_0 : i32, i32, i32
  }
  func.func @transform_7(%arg0: i32) -> (i32, i32) {
    %c0_i32 = arith.constant 0 : i32
    %c0_i32_0 = arith.constant 0 : i32
    return %arg0, %c0_i32 : i32, i32
  }
}

</mosaic_0001>

<llo_original>
// kernel: tpu_custom_call.1
$region0: #{tpu_custom_call.1}
  #allocation0 [shape = 'u32[]', space=smem, size = 0x4, offset = 0x4, fixed_abs, tag = 'smem constant byte address 0x4 - core index']
  #allocation1 [shape = 'u32[144,128]{1,0:T(1,128)}', space=vmem, size = 0x12000, scoped, tag = 'internal scratch']
  %s0 = inlined_call_operand.hbm [shape: f32[8,256], index: 0, kind: input, shape index: {}]
  %s1 = inlined_call_operand.hbm [shape: bf16[128,256], index: 1, kind: input, shape index: {}]
  %s2 = inlined_call_operand.hbm [shape: bf16[256,128], index: 2, kind: input, shape index: {}]
  %s3 = inlined_call_operand.vmem [shape: f32[1,256], index: 3, kind: input, shape index: {}]
  %s4 = inlined_call_operand.vmem [shape: f32[1,128], index: 4, kind: input, shape index: {}]
  %s5 = inlined_call_operand.hbm [shape: f32[6,8,128], index: 5, kind: input, shape index: {}]
  %s6 = inlined_call_operand.hbm [shape: f32[5,8,256], index: 6, kind: input, shape index: {}]
  %s7 = inlined_call_operand.hbm [shape: f32[8,256], index: 7, kind: output, shape index: {}]
  %s8 = sld [smem:[#allocation0]]
  $region58: #{tpu_custom_call.1} parent=0
    _
  %s10 = ssub.s32 1, %s8
  %s11 = scalar_select 0, %s10, %s8
  $region1: #{tpu_custom_call.1} parent=0
    #allocation2 [shape = 'u8[8192]{0}', space=vmem, size = 0x2000, scoped, tag = 'input window, operand 0, single buffered']
    #allocation3 [shape = 's32[1]{0}', space=sflag, size = 0x4, scoped, tag = 'scoped memory for tpu_custom_call.1']
    #allocation4 [shape = 's32[1]{0}', space=sflag, size = 0x4, scoped, tag = 'scoped memory for tpu_custom_call.1']
    #allocation5 [shape = 'u8[65536]{0}', space=vmem, size = 0x10000, scoped, tag = 'input window, operand 1, single buffered']
    #allocation6 [shape = 's32[1]{0}', space=sflag, size = 0x4, scoped, tag = 'scoped memory for tpu_custom_call.1']
    #allocation7 [shape = 'u8[65536]{0}', space=vmem, size = 0x10000, scoped, tag = 'input window, operand 2, single buffered']
    #allocation8 [shape = 'u8[24576]{0}', space=vmem, size = 0x6000, scoped, tag = 'input window, operand 5, single buffered']
    #allocation9 [shape = 's32[1]{0}', space=sflag, size = 0x4, scoped, tag = 'scoped memory for tpu_custom_call.1']
    #allocation10 [shape = 'u8[40960]{0}', space=vmem, size = 0xa000, scoped, tag = 'input window, operand 6, single buffered']
    #allocation11 [shape = 'u8[8192]{0}', space=vmem, size = 0x2000, scoped, tag = 'output window, operand 0, single buffered']
    %12 = vsyncpa [#allocation3], 0
    %13 = vsyncpa [#allocation6], 0
    %14 = vsyncpa [#allocation9], 0
    %15 = vsyncpa [#allocation4], 0
    // Predicated region
    $region2: #{tpu_custom_call.1} parent=1 // pred_check
      _
    $region3: #{tpu_custom_call.1} parent=1 // pred_check_branch
      %17 = sbr.rel (0) target = $region5
    $region4: #{tpu_custom_call.1} parent=1 // pred_region
      %s19 = ssub.s32 256, 256
      %20 = vsyncadd [#allocation3], %s19
      %s22 = sshll.u32 [#allocation2], 4
      %s23 = int_to_ptr.vmem [resolvable:$true] %s22
      %25 = dma.hbm_to_vmem [thread:$0]  %s0, 256, %s23, [#allocation3]
    $region5: #{tpu_custom_call.1} parent=1 // pred_fallthru
      _
    // Predicated region
    $region6: #{tpu_custom_call.1} parent=1 // pred_check
      _
    $region7: #{tpu_custom_call.1} parent=1 // pred_check_branch
      %27 = sbr.rel (0) target = $region9
    $region8: #{tpu_custom_call.1} parent=1 // pred_region
      %s29 = ssub.s32 2048, 2048
      %30 = vsyncadd [#allocation6], %s29
      %s31 = sshll.u32 [#allocation5], 4
      %s32 = int_to_ptr.vmem [resolvable:$true] %s31
      %37 = dma.hbm_to_vmem [thread:$0]  %s1, 2048, %s32, [#allocation6], 128, 128, 8
    $region9: #{tpu_custom_call.1} parent=1 // pred_fallthru
      _
    // Predicated region
    $region10: #{tpu_custom_call.1} parent=1 // pred_check
      _
    $region11: #{tpu_custom_call.1} parent=1 // pred_check_branch
      %39 = sbr.rel (0) target = $region13
    $region12: #{tpu_custom_call.1} parent=1 // pred_region
      %s41 = ssub.s32 2048, 2048
      %42 = vsyncadd [#allocation6], %s41
      %s43 = sshll.u32 [#allocation7], 4
      %s44 = int_to_ptr.vmem [resolvable:$true] %s43
      %49 = dma.hbm_to_vmem [thread:$0]  %s2, 2048, %s44, [#allocation6], 64, 64, 4
    $region13: #{tpu_custom_call.1} parent=1 // pred_fallthru
      _
    // Predicated region
    $region14: #{tpu_custom_call.1} parent=1 // pred_check
      _
    $region15: #{tpu_custom_call.1} parent=1 // pred_check_branch
      %51 = sbr.rel (0) target = $region17
    $region16: #{tpu_custom_call.1} parent=1 // pred_region
      _
    $region17: #{tpu_custom_call.1} parent=1 // pred_fallthru
      _
    // Predicated region
    $region18: #{tpu_custom_call.1} parent=1 // pred_check
      _
    $region19: #{tpu_custom_call.1} parent=1 // pred_check_branch
      %53 = sbr.rel (0) target = $region21
    $region20: #{tpu_custom_call.1} parent=1 // pred_region
      _
    $region21: #{tpu_custom_call.1} parent=1 // pred_fallthru
      _
    // Predicated region
    $region22: #{tpu_custom_call.1} parent=1 // pred_check
      _
    $region23: #{tpu_custom_call.1} parent=1 // pred_check_branch
      %55 = sbr.rel (0) target = $region25
    $region24: #{tpu_custom_call.1} parent=1 // pred_region
      %s57 = ssub.s32 768, 768
      %58 = vsyncadd [#allocation9], %s57
      %s59 = sshll.u32 [#allocation8], 4
      %s60 = int_to_ptr.vmem [resolvable:$true] %s59
      %65 = dma.hbm_to_vmem [thread:$0]  %s5, 768, %s60, [#allocation9], 128, 128, 8
    $region25: #{tpu_custom_call.1} parent=1 // pred_fallthru
      _
    // Predicated region
    $region26: #{tpu_custom_call.1} parent=1 // pred_check
      _
    $region27: #{tpu_custom_call.1} parent=1 // pred_check_branch
      %67 = sbr.rel (0) target = $region29
    $region28: #{tpu_custom_call.1} parent=1 // pred_region
      %s69 = ssub.s32 1280, 1280
      %70 = vsyncadd [#allocation9], %s69
      %s71 = sshll.u32 [#allocation10], 4
      %s72 = int_to_ptr.vmem [resolvable:$true] %s71
      %77 = dma.hbm_to_vmem [thread:$0]  %s6, 1280, %s72, [#allocation9], 256, 256, 16
    $region29: #{tpu_custom_call.1} parent=1 // pred_fallthru
      _
    // Predicated region
    $region30: #{tpu_custom_call.1} parent=1 // pred_check
      _
    $region31: #{tpu_custom_call.1} parent=1 // pred_check_branch
      %79 = sbr.rel (0) target = $region33
    $region32: #{tpu_custom_call.1} parent=1 // pred_region
      %80 = dma.done [#allocation3], 256
    $region33: #{tpu_custom_call.1} parent=1 // pred_fallthru
      _
    // Predicated region
    $region34: #{tpu_custom_call.1} parent=1 // pred_check
      _
    $region35: #{tpu_custom_call.1} parent=1 // pred_check_branch
      %82 = sbr.rel (0) target = $region37
    $region36: #{tpu_custom_call.1} parent=1 // pred_region
      %83 = dma.done [#allocation6], 2048
    $region37: #{tpu_custom_call.1} parent=1 // pred_fallthru
      _
    // Predicated region
    $region38: #{tpu_custom_call.1} parent=1 // pred_check
      _
    $region39: #{tpu_custom_call.1} parent=1 // pred_check_branch
      %85 = sbr.rel (0) target = $region41
    $region40: #{tpu_custom_call.1} parent=1 // pred_region
      %86 = dma.done [#allocation6], 2048
    $region41: #{tpu_custom_call.1} parent=1 // pred_fallthru
      _
    // Predicated region
    $region42: #{tpu_custom_call.1} parent=1 // pred_check
      _
    $region43: #{tpu_custom_call.1} parent=1 // pred_check_branch
      %88 = sbr.rel (0) target = $region45
    $region44: #{tpu_custom_call.1} parent=1 // pred_region
      %89 = dma.done [#allocation9], 768
    $region45: #{tpu_custom_call.1} parent=1 // pred_fallthru
      _
    // Predicated region
    $region46: #{tpu_custom_call.1} parent=1 // pred_check
      _
    $region47: #{tpu_custom_call.1} parent=1 // pred_check_branch
      %91 = sbr.rel (0) target = $region49
    $region48: #{tpu_custom_call.1} parent=1 // pred_region
      %92 = dma.done [#allocation9], 1280
    $region49: #{tpu_custom_call.1} parent=1 // pred_fallthru
      _
    %v94 = vld [vmem:[#allocation5] sm:$0xff]
    %v95 = vld [vmem:[#allocation5 + $0x8] sm:$0xff]
    %v96 = vld [vmem:[#allocation5 + $0x10] sm:$0xff]
    %v97 = vld [vmem:[#allocation5 + $0x18] sm:$0xff]
    %v98 = vld [vmem:[#allocation5 + $0x20] sm:$0xff]
    %v99 = vld [vmem:[#allocation5 + $0x28] sm:$0xff]
    %v100 = vld [vmem:[#allocation5 + $0x30] sm:$0xff]
    %v101 = vld [vmem:[#allocation5 + $0x38] sm:$0xff]
    %v102 = vld [vmem:[#allocation5 + $0x40] sm:$0xff]
    %v103 = vld [vmem:[#allocation5 + $0x48] sm:$0xff]
    %v104 = vld [vmem:[#allocation5 + $0x50] sm:$0xff]
    %v105 = vld [vmem:[#allocation5 + $0x58] sm:$0xff]
    %v106 = vld [vmem:[#allocation5 + $0x60] sm:$0xff]
    %v107 = vld [vmem:[#allocation5 + $0x68] sm:$0xff]
    %v108 = vld [vmem:[#allocation5 + $0x70] sm:$0xff]
    %v109 = vld [vmem:[#allocation5 + $0x78] sm:$0xff]
    %v110 = vld [vmem:[#allocation7] sm:$0xf]
    %v111 = vld [vmem:[#allocation7 + $0x4] sm:$0xf]
    %v112 = vld [vmem:[#allocation7 + $0x8] sm:$0xf]
    %v113 = vld [vmem:[#allocation7 + $0xc] sm:$0xf]
    %v114 = vld [vmem:[#allocation7 + $0x10] sm:$0xf]
    %v115 = vld [vmem:[#allocation7 + $0x14] sm:$0xf]
    %v116 = vld [vmem:[#allocation7 + $0x18] sm:$0xf]
    %v117 = vld [vmem:[#allocation7 + $0x1c] sm:$0xf]
    %v118 = vld [vmem:[#allocation7 + $0x20] sm:$0xf]
    %v119 = vld [vmem:[#allocation7 + $0x24] sm:$0xf]
    %v120 = vld [vmem:[#allocation7 + $0x28] sm:$0xf]
    %v121 = vld [vmem:[#allocation7 + $0x2c] sm:$0xf]
    %v122 = vld [vmem:[#allocation7 + $0x30] sm:$0xf]
    %v123 = vld [vmem:[#allocation7 + $0x34] sm:$0xf]
    %v124 = vld [vmem:[#allocation7 + $0x38] sm:$0xf]
    %v125 = vld [vmem:[#allocation7 + $0x3c] sm:$0xf]
    %v126 = vld [vmem:[#allocation7 + $0x40] sm:$0xf]
    %v127 = vld [vmem:[#allocation7 + $0x44] sm:$0xf]
    %v128 = vld [vmem:[#allocation7 + $0x48] sm:$0xf]
    %v129 = vld [vmem:[#allocation7 + $0x4c] sm:$0xf]
    %v130 = vld [vmem:[#allocation7 + $0x50] sm:$0xf]
    %v131 = vld [vmem:[#allocation7 + $0x54] sm:$0xf]
    %v132 = vld [vmem:[#allocation7 + $0x58] sm:$0xf]
    %v133 = vld [vmem:[#allocation7 + $0x5c] sm:$0xf]
    %v134 = vld [vmem:[#allocation7 + $0x60] sm:$0xf]
    %v135 = vld [vmem:[#allocation7 + $0x64] sm:$0xf]
    %v136 = vld [vmem:[#allocation7 + $0x68] sm:$0xf]
    %v137 = vld [vmem:[#allocation7 + $0x6c] sm:$0xf]
    %v138 = vld [vmem:[#allocation7 + $0x70] sm:$0xf]
    %v139 = vld [vmem:[#allocation7 + $0x74] sm:$0xf]
    %v140 = vld [vmem:[#allocation7 + $0x78] sm:$0xf]
    %v141 = vld [vmem:[#allocation7 + $0x7c] sm:$0xf]
    %v142 = vld [vmem:[%s4] sm:$0x1]
    %v144 = vlaneseq
    %v145 = vshrl.u32 %v144, 7
    %v146 = vsub.s32 0, %v145
    %v147 = vrot.slane %v142, %v146
    %v149 = vld [vmem:[%s3] sm:$0x3]
    %v151 = vlaneseq
    %v152 = vshrl.u32 %v151, 7
    %v153 = vsub.s32 0, %v152
    %v154 = vrot.slane %v149, %v153
    %v155 = vlaneseq
    %v156 = vshrl.u32 %v155, 7
    %v157 = vsub.s32 1, %v156
    %v158 = vrot.slane %v149, %v157
    %v161 = vld [vmem:[#allocation2] sm:$0xff]
    %v162 = vld [vmem:[#allocation2 + $0x8] sm:$0xff]
    %v163 = vpack.c.bf16 %v161, %v161
    %v164 = vpack.c.bf16 %v162, %v162
    %v165 = vld [vmem:[#allocation8] sm:$0xff]
    %v198 = vunpack.c.l.b16 %v110
    %v199 = vunpack.c.l.b16 %v111
    %v200 = vunpack.c.l.b16 %v112
    %v201 = vunpack.c.l.b16 %v113
    %v202 = vunpack.c.l.b16 %v114
    %v203 = vunpack.c.l.b16 %v115
    %v204 = vunpack.c.l.b16 %v116
    %v205 = vunpack.c.l.b16 %v117
    %v206 = vunpack.c.l.b16 %v118
    %v207 = vunpack.c.l.b16 %v119
    %v208 = vunpack.c.l.b16 %v120
    %v209 = vunpack.c.l.b16 %v121
    %v210 = vunpack.c.l.b16 %v122
    %v211 = vunpack.c.l.b16 %v123
    %v212 = vunpack.c.l.b16 %v124
    %v213 = vunpack.c.l.b16 %v125
    %v214 = vunpack.c.l.b16 %v126
    %v215 = vunpack.c.l.b16 %v127
    %v216 = vunpack.c.l.b16 %v128
    %v217 = vunpack.c.l.b16 %v129
    %v218 = vunpack.c.l.b16 %v130
    %v219 = vunpack.c.l.b16 %v131
    %v220 = vunpack.c.l.b16 %v132
    %v221 = vunpack.c.l.b16 %v133
    %v222 = vunpack.c.l.b16 %v134
    %v223 = vunpack.c.l.b16 %v135
    %v224 = vunpack.c.l.b16 %v136
    %v225 = vunpack.c.l.b16 %v137
    %v226 = vunpack.c.l.b16 %v138
    %v227 = vunpack.c.l.b16 %v139
    %v228 = vunpack.c.l.b16 %v140
    %v229 = vunpack.c.l.b16 %v141
    %v230 = vpack.c.b16 %v199, %v198
    %v231 = vpack.c.b16 %v201, %v200
    %v232 = vpack.c.b16 %v203, %v202
    %v233 = vpack.c.b16 %v205, %v204
    %v234 = vpack.c.b16 %v207, %v206
    %v235 = vpack.c.b16 %v209, %v208
    %v236 = vpack.c.b16 %v211, %v210
    %v237 = vpack.c.b16 %v213, %v212
    %v238 = vpack.c.b16 %v215, %v214
    %v239 = vpack.c.b16 %v217, %v216
    %v240 = vpack.c.b16 %v219, %v218
    %v241 = vpack.c.b16 %v221, %v220
    %v242 = vpack.c.b16 %v223, %v222
    %v243 = vpack.c.b16 %v225, %v224
    %v244 = vpack.c.b16 %v227, %v226
    %v245 = vpack.c.b16 %v229, %v228
    %262 = vmatprep.subr.bf16.mxu0 0
    %263 = vmatpush1.bf16.msra.mxu0 %v237
    %264 = vmatprep.subr.bf16.mxu0 0
    %265 = vmatpush1.bf16.msra.mxu0 %v236
    %266 = vmatprep.subr.bf16.mxu0 0
    %267 = vmatpush1.bf16.msra.mxu0 %v235
    %268 = vmatprep.subr.bf16.mxu0 0
    %269 = vmatpush1.bf16.msra.mxu0 %v234
    %270 = vmatprep.subr.bf16.mxu0 0
    %271 = vmatpush1.bf16.msra.mxu0 %v233
    %272 = vmatprep.subr.bf16.mxu0 0
    %273 = vmatpush1.bf16.msra.mxu0 %v232
    %274 = vmatprep.subr.bf16.mxu0 0
    %275 = vmatpush1.bf16.msra.mxu0 %v231
    %276 = vmatprep.subr.bf16.mxu0 0
    %277 = vmatpush1.bf16.msra.mxu0 %v230
    %278 = vmatprep.subr.bf16.mxu0 0
    %279 = vmatpush2.bf16.msra.mxu0 %v245
    %280 = vmatprep.subr.bf16.mxu0 0
    %281 = vmatpush2.bf16.msra.mxu0 %v244
    %282 = vmatprep.subr.bf16.mxu0 0
    %283 = vmatpush2.bf16.msra.mxu0 %v243
    %284 = vmatprep.subr.bf16.mxu0 0
    %285 = vmatpush2.bf16.msra.mxu0 %v242
    %286 = vmatprep.subr.bf16.mxu0 0
    %287 = vmatpush2.bf16.msra.mxu0 %v241
    %288 = vmatprep.subr.bf16.mxu0 0
    %289 = vmatpush2.bf16.msra.mxu0 %v240
    %290 = vmatprep.subr.bf16.mxu0 0
    %291 = vmatpush2.bf16.msra.mxu0 %v239
    %292 = vmatprep.subr.bf16.mxu0 0
    %293 = vmatpush2.bf16.msra.mxu0 %v238
    %294 = vmatprep.mubr.bf16.mxu0 %v164
    %295 = vmatmul.mubr.bf16.gmra.mxu0 %v163
    %v296 = vpop.f32.mrf.mxu0
    %v297 = vadd.f32 %v147, %v296
    %v298 = vpop.f32.mrf.mxu0
    %v299 = vpop.f32.mrf.mxu0
    %v300 = vpop.f32.mrf.mxu0
    %301 = vdwg.mxu0
    %v302 = vxor.u32 %v297, 2147483648
    %v303 = vmul.f32 %v302, 1.442695
    %v304 = vpow.pop %v303
    %v305 = vadd.f32 %v304, 1.0
    %v306 = vrcp.pop %v305
    %v307 = vmul.f32 1.0, %v306
    %vm308 = vcmp.gt.f32.partialorder %v307, %v165
    %v309 = vsel %vm308, 1, 0
    %v310 = vcvt.s32.f32 %v309
    %v311 = vpack.c.bf16 %v310, %v310
    %v312 = vld [vmem:[#allocation10] sm:$0xff]
    %v313 = vld [vmem:[#allocation10 + $0x8] sm:$0xff]
    %v330 = vunpack.c.l.b16 %v94
    %v331 = vunpack.c.h.b16 %v94
    %v332 = vunpack.c.l.b16 %v95
    %v333 = vunpack.c.h.b16 %v95
    %v334 = vunpack.c.l.b16 %v96
    %v335 = vunpack.c.h.b16 %v96
    %v336 = vunpack.c.l.b16 %v97
    %v337 = vunpack.c.h.b16 %v97
    %v338 = vunpack.c.l.b16 %v98
    %v339 = vunpack.c.h.b16 %v98
    %v340 = vunpack.c.l.b16 %v99
    %v341 = vunpack.c.h.b16 %v99
    %v342 = vunpack.c.l.b16 %v100
    %v343 = vunpack.c.h.b16 %v100
    %v344 = vunpack.c.l.b16 %v101
    %v345 = vunpack.c.h.b16 %v101
    %v346 = vunpack.c.l.b16 %v102
    %v347 = vunpack.c.h.b16 %v102
    %v348 = vunpack.c.l.b16 %v103
    %v349 = vunpack.c.h.b16 %v103
    %v350 = vunpack.c.l.b16 %v104
    %v351 = vunpack.c.h.b16 %v104
    %v352 = vunpack.c.l.b16 %v105
    %v353 = vunpack.c.h.b16 %v105
    %v354 = vunpack.c.l.b16 %v106
    %v355 = vunpack.c.h.b16 %v106
    %v356 = vunpack.c.l.b16 %v107
    %v357 = vunpack.c.h.b16 %v107
    %v358 = vunpack.c.l.b16 %v108
    %v359 = vunpack.c.h.b16 %v108
    %v360 = vunpack.c.l.b16 %v109
    %v361 = vunpack.c.h.b16 %v109
    %v362 = vpack.c.b16 %v332, %v330
    %v363 = vpack.c.b16 %v333, %v331
    %v364 = vpack.c.b16 %v336, %v334
    %v365 = vpack.c.b16 %v337, %v335
    %v366 = vpack.c.b16 %v340, %v338
    %v367 = vpack.c.b16 %v341, %v339
    %v368 = vpack.c.b16 %v344, %v342
    %v369 = vpack.c.b16 %v345, %v343
    %v370 = vpack.c.b16 %v348, %v346
    %v371 = vpack.c.b16 %v349, %v347
    %v372 = vpack.c.b16 %v352, %v350
    %v373 = vpack.c.b16 %v353, %v351
    %v374 = vpack.c.b16 %v356, %v354
    %v375 = vpack.c.b16 %v357, %v355
    %v376 = vpack.c.b16 %v360, %v358
    %v377 = vpack.c.b16 %v361, %v359
    %394 = vmatprep.subr.bf16.mxu0 %v377
    %395 = vmatpush1.bf16.msra.mxu0 %v376
    %396 = vmatprep.subr.bf16.mxu0 %v375
    %397 = vmatpush1.bf16.msra.mxu0 %v374
    %398 = vmatprep.subr.bf16.mxu0 %v373
    %399 = vmatpush1.bf16.msra.mxu0 %v372
    %400 = vmatprep.subr.bf16.mxu0 %v371
    %401 = vmatpush1.bf16.msra.mxu0 %v370
    %402 = vmatprep.subr.bf16.mxu0 %v369
    %403 = vmatpush1.bf16.msra.mxu0 %v368
    %404 = vmatprep.subr.bf16.mxu0 %v367
    %405 = vmatpush1.bf16.msra.mxu0 %v366
    %406 = vmatprep.subr.bf16.mxu0 %v365
    %407 = vmatpush1.bf16.msra.mxu0 %v364
    %408 = vmatprep.subr.bf16.mxu0 %v363
    %409 = vmatpush1.bf16.msra.mxu0 %v362
    %410 = vmatprep.subr.bf16.mxu0 0
    %411 = vmatpush2.bf16.msra.mxu0 0
    %412 = vmatprep.subr.bf16.mxu0 0
    %413 = vmatpush2.bf16.msra.mxu0 0
    %414 = vmatprep.subr.bf16.mxu0 0
    %415 = vmatpush2.bf16.msra.mxu0 0
    %416 = vmatprep.subr.bf16.mxu0 0
    %417 = vmatpush2.bf16.msra.mxu0 0
    %418 = vmatprep.subr.bf16.mxu0 0
    %419 = vmatpush2.bf16.msra.mxu0 0
    %420 = vmatprep.subr.bf16.mxu0 0
    %421 = vmatpush2.bf16.msra.mxu0 0
    %422 = vmatprep.subr.bf16.mxu0 0
    %423 = vmatpush2.bf16.msra.mxu0 0
    %424 = vmatprep.subr.bf16.mxu0 0
    %425 = vmatpush2.bf16.msra.mxu0 0
    %426 = vmatprep.mubr.bf16.mxu0 0
    %427 = vmatmul.mubr.bf16.gmra.mxu0 %v311
    %v428 = vpop.f32.mrf.mxu0
    %v429 = vadd.f32 %v154, %v428
    %v430 = vpop.f32.mrf.mxu0
    %v431 = vadd.f32 %v158, %v430
    %v432 = vpop.f32.mrf.mxu0
    %v433 = vpop.f32.mrf.mxu0
    %434 = vdwg.mxu0
    %v435 = vxor.u32 %v429, 2147483648
    %v436 = vxor.u32 %v431, 2147483648
    %v437 = vmul.f32 %v435, 1.442695
    %v438 = vpow.pop %v437
    %v439 = vmul.f32 %v436, 1.442695
    %v440 = vpow.pop %v439
    %v441 = vadd.f32 %v438, 1.0
    %v442 = vadd.f32 %v440, 1.0
    %v443 = vrcp.pop %v441
    %v444 = vmul.f32 1.0, %v443
    %v445 = vrcp.pop %v442
    %v446 = vmul.f32 1.0, %v445
    %vm447 = vcmp.gt.f32.partialorder %v444, %v312
    %vm448 = vcmp.gt.f32.partialorder %v446, %v313
    %v449 = vsel %vm447, 1, 0
    %v450 = vsel %vm448, 1, 0
    %v451 = vcvt.s32.f32 %v449
    %v452 = vcvt.s32.f32 %v450
    %v453 = vpack.c.bf16 %v451, %v451
    %v454 = vpack.c.bf16 %v452, %v452
    %s455 = scalar_lea.vmem [#allocation8], 8
    %v456 = vld [vmem:[%s455] sm:$0xff]
    %457 = vmatprep.subr.bf16.mxu0 0
    %458 = vmatpush1.bf16.msra.mxu0 %v237
    %459 = vmatprep.subr.bf16.mxu0 0
    %460 = vmatpush1.bf16.msra.mxu0 %v236
    %461 = vmatprep.subr.bf16.mxu0 0
    %462 = vmatpush1.bf16.msra.mxu0 %v235
    %463 = vmatprep.subr.bf16.mxu0 0
    %464 = vmatpush1.bf16.msra.mxu0 %v234
    %465 = vmatprep.subr.bf16.mxu0 0
    %466 = vmatpush1.bf16.msra.mxu0 %v233
    %467 = vmatprep.subr.bf16.mxu0 0
    %468 = vmatpush1.bf16.msra.mxu0 %v232
    %469 = vmatprep.subr.bf16.mxu0 0
    %470 = vmatpush1.bf16.msra.mxu0 %v231
    %471 = vmatprep.subr.bf16.mxu0 0
    %472 = vmatpush1.bf16.msra.mxu0 %v230
    %473 = vmatprep.subr.bf16.mxu0 0
    %474 = vmatpush2.bf16.msra.mxu0 %v245
    %475 = vmatprep.subr.bf16.mxu0 0
    %476 = vmatpush2.bf16.msra.mxu0 %v244
    %477 = vmatprep.subr.bf16.mxu0 0
    %478 = vmatpush2.bf16.msra.mxu0 %v243
    %479 = vmatprep.subr.bf16.mxu0 0
    %480 = vmatpush2.bf16.msra.mxu0 %v242
    %481 = vmatprep.subr.bf16.mxu0 0
    %482 = vmatpush2.bf16.msra.mxu0 %v241
    %483 = vmatprep.subr.bf16.mxu0 0
    %484 = vmatpush2.bf16.msra.mxu0 %v240
    %485 = vmatprep.subr.bf16.mxu0 0
    %486 = vmatpush2.bf16.msra.mxu0 %v239
    %487 = vmatprep.subr.bf16.mxu0 0
    %488 = vmatpush2.bf16.msra.mxu0 %v238
    %489 = vmatprep.mubr.bf16.mxu0 %v454
    %490 = vmatmul.mubr.bf16.gmra.mxu0 %v453
    %v491 = vpop.f32.mrf.mxu0
    %v492 = vadd.f32 %v147, %v491
    %v493 = vpop.f32.mrf.mxu0
    %v494 = vpop.f32.mrf.mxu0
    %v495 = vpop.f32.mrf.mxu0
    %496 = vdwg.mxu0
    %v497 = vxor.u32 %v492, 2147483648
    %v498 = vmul.f32 %v497, 1.442695
    %v499 = vpow.pop %v498
    %v500 = vadd.f32 %v499, 1.0
    %v501 = vrcp.pop %v500
    %v502 = vmul.f32 1.0, %v501
    %vm503 = vcmp.gt.f32.partialorder %v502, %v456
    %v504 = vsel %vm503, 1, 0
    %v505 = vcvt.s32.f32 %v504
    %v506 = vpack.c.bf16 %v505, %v505
    %s507 = scalar_lea.vmem [#allocation10], 16
    %v508 = vld [vmem:[%s507] sm:$0xff]
    %v509 = vld [vmem:[%s507 + $0x8] sm:$0xff]
    %510 = vmatprep.subr.bf16.mxu0 %v377
    %511 = vmatpush1.bf16.msra.mxu0 %v376
    %512 = vmatprep.subr.bf16.mxu0 %v375
    %513 = vmatpush1.bf16.msra.mxu0 %v374
    %514 = vmatprep.subr.bf16.mxu0 %v373
    %515 = vmatpush1.bf16.msra.mxu0 %v372
    %516 = vmatprep.subr.bf16.mxu0 %v371
    %517 = vmatpush1.bf16.msra.mxu0 %v370
    %518 = vmatprep.subr.bf16.mxu0 %v369
    %519 = vmatpush1.bf16.msra.mxu0 %v368
    %520 = vmatprep.subr.bf16.mxu0 %v367
    %521 = vmatpush1.bf16.msra.mxu0 %v366
    %522 = vmatprep.subr.bf16.mxu0 %v365
    %523 = vmatpush1.bf16.msra.mxu0 %v364
    %524 = vmatprep.subr.bf16.mxu0 %v363
    %525 = vmatpush1.bf16.msra.mxu0 %v362
    %526 = vmatprep.subr.bf16.mxu0 0
    %527 = vmatpush2.bf16.msra.mxu0 0
    %528 = vmatprep.subr.bf16.mxu0 0
    %529 = vmatpush2.bf16.msra.mxu0 0
    %530 = vmatprep.subr.bf16.mxu0 0
    %531 = vmatpush2.bf16.msra.mxu0 0
    %532 = vmatprep.subr.bf16.mxu0 0
    %533 = vmatpush2.bf16.msra.mxu0 0
    %534 = vmatprep.subr.bf16.mxu0 0
    %535 = vmatpush2.bf16.msra.mxu0 0
    %536 = vmatprep.subr.bf16.mxu0 0
    %537 = vmatpush2.bf16.msra.mxu0 0
    %538 = vmatprep.subr.bf16.mxu0 0
    %539 = vmatpush2.bf16.msra.mxu0 0
    %540 = vmatprep.subr.bf16.mxu0 0
    %541 = vmatpush2.bf16.msra.mxu0 0
    %542 = vmatprep.mubr.bf16.mxu0 0
    %543 = vmatmul.mubr.bf16.gmra.mxu0 %v506
    %v544 = vpop.f32.mrf.mxu0
    %v545 = vadd.f32 %v154, %v544
    %v546 = vpop.f32.mrf.mxu0
    %v547 = vadd.f32 %v158, %v546
    %v548 = vpop.f32.mrf.mxu0
    %v549 = vpop.f32.mrf.mxu0
    %550 = vdwg.mxu0
    %v551 = vxor.u32 %v545, 2147483648
    %v552 = vxor.u32 %v547, 2147483648
    %v553 = vmul.f32 %v551, 1.442695
    %v554 = vpow.pop %v553
    %v555 = vmul.f32 %v552, 1.442695
    %v556 = vpow.pop %v555
    %v557 = vadd.f32 %v554, 1.0
    %v558 = vadd.f32 %v556, 1.0
    %v559 = vrcp.pop %v557
    %v560 = vmul.f32 1.0, %v559
    %v561 = vrcp.pop %v558
    %v562 = vmul.f32 1.0, %v561
    %vm563 = vcmp.gt.f32.partialorder %v560, %v508
    %vm564 = vcmp.gt.f32.partialorder %v562, %v509
    %v565 = vsel %vm563, 1, 0
    %v566 = vsel %vm564, 1, 0
    %v567 = vcvt.s32.f32 %v565
    %v568 = vcvt.s32.f32 %v566
    %v569 = vpack.c.bf16 %v567, %v567
    %v570 = vpack.c.bf16 %v568, %v568
    %s571 = scalar_lea.vmem [#allocation8], 16
    %v572 = vld [vmem:[%s571] sm:$0xff]
    %573 = vmatprep.subr.bf16.mxu0 0
    %574 = vmatpush1.bf16.msra.mxu0 %v237
    %575 = vmatprep.subr.bf16.mxu0 0
    %576 = vmatpush1.bf16.msra.mxu0 %v236
    %577 = vmatprep.subr.bf16.mxu0 0
    %578 = vmatpush1.bf16.msra.mxu0 %v235
    %579 = vmatprep.subr.bf16.mxu0 0
    %580 = vmatpush1.bf16.msra.mxu0 %v234
    %581 = vmatprep.subr.bf16.mxu0 0
    %582 = vmatpush1.bf16.msra.mxu0 %v233
    %583 = vmatprep.subr.bf16.mxu0 0
    %584 = vmatpush1.bf16.msra.mxu0 %v232
    %585 = vmatprep.subr.bf16.mxu0 0
    %586 = vmatpush1.bf16.msra.mxu0 %v231
    %587 = vmatprep.subr.bf16.mxu0 0
    %588 = vmatpush1.bf16.msra.mxu0 %v230
    %589 = vmatprep.subr.bf16.mxu0 0
    %590 = vmatpush2.bf16.msra.mxu0 %v245
    %591 = vmatprep.subr.bf16.mxu0 0
    %592 = vmatpush2.bf16.msra.mxu0 %v244
    %593 = vmatprep.subr.bf16.mxu0 0
    %594 = vmatpush2.bf16.msra.mxu0 %v243
    %595 = vmatprep.subr.bf16.mxu0 0
    %596 = vmatpush2.bf16.msra.mxu0 %v242
    %597 = vmatprep.subr.bf16.mxu0 0
    %598 = vmatpush2.bf16.msra.mxu0 %v241
    %599 = vmatprep.subr.bf16.mxu0 0
    %600 = vmatpush2.bf16.msra.mxu0 %v240
    %601 = vmatprep.subr.bf16.mxu0 0
    %602 = vmatpush2.bf16.msra.mxu0 %v239
    %603 = vmatprep.subr.bf16.mxu0 0
    %604 = vmatpush2.bf16.msra.mxu0 %v238
    %605 = vmatprep.mubr.bf16.mxu0 %v570
    %606 = vmatmul.mubr.bf16.gmra.mxu0 %v569
    %v607 = vpop.f32.mrf.mxu0
    %v608 = vadd.f32 %v147, %v607
    %v609 = vpop.f32.mrf.mxu0
    %v610 = vpop.f32.mrf.mxu0
    %v611 = vpop.f32.mrf.mxu0
    %612 = vdwg.mxu0
    %v613 = vxor.u32 %v608, 2147483648
    %v614 = vmul.f32 %v613, 1.442695
    %v615 = vpow.pop %v614
    %v616 = vadd.f32 %v615, 1.0
    %v617 = vrcp.pop %v616
    %v618 = vmul.f32 1.0, %v617
    %vm619 = vcmp.gt.f32.partialorder %v618, %v572
    %v620 = vsel %vm619, 1, 0
    %v621 = vcvt.s32.f32 %v620
    %v622 = vpack.c.bf16 %v621, %v621
    %s623 = scalar_lea.vmem [#allocation10], 32
    %v624 = vld [vmem:[%s623] sm:$0xff]
    %v625 = vld [vmem:[%s623 + $0x8] sm:$0xff]
    %626 = vmatprep.subr.bf16.mxu0 %v377
    %627 = vmatpush1.bf16.msra.mxu0 %v376
    %628 = vmatprep.subr.bf16.mxu0 %v375
    %629 = vmatpush1.bf16.msra.mxu0 %v374
    %630 = vmatprep.subr.bf16.mxu0 %v373
    %631 = vmatpush1.bf16.msra.mxu0 %v372
    %632 = vmatprep.subr.bf16.mxu0 %v371
    %633 = vmatpush1.bf16.msra.mxu0 %v370
    %634 = vmatprep.subr.bf16.mxu0 %v369
    %635 = vmatpush1.bf16.msra.mxu0 %v368
    %636 = vmatprep.subr.bf16.mxu0 %v367
    %637 = vmatpush1.bf16.msra.mxu0 %v366
    %638 = vmatprep.subr.bf16.mxu0 %v365
    %639 = vmatpush1.bf16.msra.mxu0 %v364
    %640 = vmatprep.subr.bf16.mxu0 %v363
    %641 = vmatpush1.bf16.msra.mxu0 %v362
    %642 = vmatprep.subr.bf16.mxu0 0
    %643 = vmatpush2.bf16.msra.mxu0 0
    %644 = vmatprep.subr.bf16.mxu0 0
    %645 = vmatpush2.bf16.msra.mxu0 0
    %646 = vmatprep.subr.bf16.mxu0 0
    %647 = vmatpush2.bf16.msra.mxu0 0
    %648 = vmatprep.subr.bf16.mxu0 0
    %649 = vmatpush2.bf16.msra.mxu0 0
    %650 = vmatprep.subr.bf16.mxu0 0
    %651 = vmatpush2.bf16.msra.mxu0 0
    %652 = vmatprep.subr.bf16.mxu0 0
    %653 = vmatpush2.bf16.msra.mxu0 0
    %654 = vmatprep.subr.bf16.mxu0 0
    %655 = vmatpush2.bf16.msra.mxu0 0
    %656 = vmatprep.subr.bf16.mxu0 0
    %657 = vmatpush2.bf16.msra.mxu0 0
    %658 = vmatprep.mubr.bf16.mxu0 0
    %659 = vmatmul.mubr.bf16.gmra.mxu0 %v622
    %v660 = vpop.f32.mrf.mxu0
    %v661 = vadd.f32 %v154, %v660
    %v662 = vpop.f32.mrf.mxu0
    %v663 = vadd.f32 %v158, %v662
    %v664 = vpop.f32.mrf.mxu0
    %v665 = vpop.f32.mrf.mxu0
    %666 = vdwg.mxu0
    %v667 = vxor.u32 %v661, 2147483648
    %v668 = vxor.u32 %v663, 2147483648
    %v669 = vmul.f32 %v667, 1.442695
    %v670 = vpow.pop %v669
    %v671 = vmul.f32 %v668, 1.442695
    %v672 = vpow.pop %v671
    %v673 = vadd.f32 %v670, 1.0
    %v674 = vadd.f32 %v672, 1.0
    %v675 = vrcp.pop %v673
    %v676 = vmul.f32 1.0, %v675
    %v677 = vrcp.pop %v674
    %v678 = vmul.f32 1.0, %v677
    %vm679 = vcmp.gt.f32.partialorder %v676, %v624
    %vm680 = vcmp.gt.f32.partialorder %v678, %v625
    %v681 = vsel %vm679, 1, 0
    %v682 = vsel %vm680, 1, 0
    %v683 = vcvt.s32.f32 %v681
    %v684 = vcvt.s32.f32 %v682
    %v685 = vpack.c.bf16 %v683, %v683
    %v686 = vpack.c.bf16 %v684, %v684
    %s687 = scalar_lea.vmem [#allocation8], 24
    %v688 = vld [vmem:[%s687] sm:$0xff]
    %689 = vmatprep.subr.bf16.mxu0 0
    %690 = vmatpush1.bf16.msra.mxu0 %v237
    %691 = vmatprep.subr.bf16.mxu0 0
    %692 = vmatpush1.bf16.msra.mxu0 %v236
    %693 = vmatprep.subr.bf16.mxu0 0
    %694 = vmatpush1.bf16.msra.mxu0 %v235
    %695 = vmatprep.subr.bf16.mxu0 0
    %696 = vmatpush1.bf16.msra.mxu0 %v234
    %697 = vmatprep.subr.bf16.mxu0 0
    %698 = vmatpush1.bf16.msra.mxu0 %v233
    %699 = vmatprep.subr.bf16.mxu0 0
    %700 = vmatpush1.bf16.msra.mxu0 %v232
    %701 = vmatprep.subr.bf16.mxu0 0
    %702 = vmatpush1.bf16.msra.mxu0 %v231
    %703 = vmatprep.subr.bf16.mxu0 0
    %704 = vmatpush1.bf16.msra.mxu0 %v230
    %705 = vmatprep.subr.bf16.mxu0 0
    %706 = vmatpush2.bf16.msra.mxu0 %v245
    %707 = vmatprep.subr.bf16.mxu0 0
    %708 = vmatpush2.bf16.msra.mxu0 %v244
    %709 = vmatprep.subr.bf16.mxu0 0
    %710 = vmatpush2.bf16.msra.mxu0 %v243
    %711 = vmatprep.subr.bf16.mxu0 0
    %712 = vmatpush2.bf16.msra.mxu0 %v242
    %713 = vmatprep.subr.bf16.mxu0 0
    %714 = vmatpush2.bf16.msra.mxu0 %v241
    %715 = vmatprep.subr.bf16.mxu0 0
    %716 = vmatpush2.bf16.msra.mxu0 %v240
    %717 = vmatprep.subr.bf16.mxu0 0
    %718 = vmatpush2.bf16.msra.mxu0 %v239
    %719 = vmatprep.subr.bf16.mxu0 0
    %720 = vmatpush2.bf16.msra.mxu0 %v238
    %721 = vmatprep.mubr.bf16.mxu0 %v686
    %722 = vmatmul.mubr.bf16.gmra.mxu0 %v685
    %v723 = vpop.f32.mrf.mxu0
    %v724 = vadd.f32 %v147, %v723
    %v725 = vpop.f32.mrf.mxu0
    %v726 = vpop.f32.mrf.mxu0
    %v727 = vpop.f32.mrf.mxu0
    %728 = vdwg.mxu0
    %v729 = vxor.u32 %v724, 2147483648
    %v730 = vmul.f32 %v729, 1.442695
    %v731 = vpow.pop %v730
    %v732 = vadd.f32 %v731, 1.0
    %v733 = vrcp.pop %v732
    %v734 = vmul.f32 1.0, %v733
    %vm735 = vcmp.gt.f32.partialorder %v734, %v688
    %v736 = vsel %vm735, 1, 0
    %v737 = vcvt.s32.f32 %v736
    %v738 = vpack.c.bf16 %v737, %v737
    %s739 = scalar_lea.vmem [#allocation10], 48
    %v740 = vld [vmem:[%s739] sm:$0xff]
    %v741 = vld [vmem:[%s739 + $0x8] sm:$0xff]
    %742 = vmatprep.subr.bf16.mxu0 %v377
    %743 = vmatpush1.bf16.msra.mxu0 %v376
    %744 = vmatprep.subr.bf16.mxu0 %v375
    %745 = vmatpush1.bf16.msra.mxu0 %v374
    %746 = vmatprep.subr.bf16.mxu0 %v373
    %747 = vmatpush1.bf16.msra.mxu0 %v372
    %748 = vmatprep.subr.bf16.mxu0 %v371
    %749 = vmatpush1.bf16.msra.mxu0 %v370
    %750 = vmatprep.subr.bf16.mxu0 %v369
    %751 = vmatpush1.bf16.msra.mxu0 %v368
    %752 = vmatprep.subr.bf16.mxu0 %v367
    %753 = vmatpush1.bf16.msra.mxu0 %v366
    %754 = vmatprep.subr.bf16.mxu0 %v365
    %755 = vmatpush1.bf16.msra.mxu0 %v364
    %756 = vmatprep.subr.bf16.mxu0 %v363
    %757 = vmatpush1.bf16.msra.mxu0 %v362
    %758 = vmatprep.subr.bf16.mxu0 0
    %759 = vmatpush2.bf16.msra.mxu0 0
    %760 = vmatprep.subr.bf16.mxu0 0
    %761 = vmatpush2.bf16.msra.mxu0 0
    %762 = vmatprep.subr.bf16.mxu0 0
    %763 = vmatpush2.bf16.msra.mxu0 0
    %764 = vmatprep.subr.bf16.mxu0 0
    %765 = vmatpush2.bf16.msra.mxu0 0
    %766 = vmatprep.subr.bf16.mxu0 0
    %767 = vmatpush2.bf16.msra.mxu0 0
    %768 = vmatprep.subr.bf16.mxu0 0
    %769 = vmatpush2.bf16.msra.mxu0 0
    %770 = vmatprep.subr.bf16.mxu0 0
    %771 = vmatpush2.bf16.msra.mxu0 0
    %772 = vmatprep.subr.bf16.mxu0 0
    %773 = vmatpush2.bf16.msra.mxu0 0
    %774 = vmatprep.mubr.bf16.mxu0 0
    %775 = vmatmul.mubr.bf16.gmra.mxu0 %v738
    %v776 = vpop.f32.mrf.mxu0
    %v777 = vadd.f32 %v154, %v776
    %v778 = vpop.f32.mrf.mxu0
    %v779 = vadd.f32 %v158, %v778
    %v780 = vpop.f32.mrf.mxu0
    %v781 = vpop.f32.mrf.mxu0
    %782 = vdwg.mxu0
    %v783 = vxor.u32 %v777, 2147483648
    %v784 = vxor.u32 %v779, 2147483648
    %v785 = vmul.f32 %v783, 1.442695
    %v786 = vpow.pop %v785
    %v787 = vmul.f32 %v784, 1.442695
    %v788 = vpow.pop %v787
    %v789 = vadd.f32 %v786, 1.0
    %v790 = vadd.f32 %v788, 1.0
    %v791 = vrcp.pop %v789
    %v792 = vmul.f32 1.0, %v791
    %v793 = vrcp.pop %v790
    %v794 = vmul.f32 1.0, %v793
    %vm795 = vcmp.gt.f32.partialorder %v792, %v740
    %vm796 = vcmp.gt.f32.partialorder %v794, %v741
    %v797 = vsel %vm795, 1, 0
    %v798 = vsel %vm796, 1, 0
    %v799 = vcvt.s32.f32 %v797
    %v800 = vcvt.s32.f32 %v798
    %v801 = vpack.c.bf16 %v799, %v799
    %v802 = vpack.c.bf16 %v800, %v800
    %s803 = scalar_lea.vmem [#allocation8], 32
    %v804 = vld [vmem:[%s803] sm:$0xff]
    %805 = vmatprep.subr.bf16.mxu0 0
    %806 = vmatpush1.bf16.msra.mxu0 %v237
    %807 = vmatprep.subr.bf16.mxu0 0
    %808 = vmatpush1.bf16.msra.mxu0 %v236
    %809 = vmatprep.subr.bf16.mxu0 0
    %810 = vmatpush1.bf16.msra.mxu0 %v235
    %811 = vmatprep.subr.bf16.mxu0 0
    %812 = vmatpush1.bf16.msra.mxu0 %v234
    %813 = vmatprep.subr.bf16.mxu0 0
    %814 = vmatpush1.bf16.msra.mxu0 %v233
    %815 = vmatprep.subr.bf16.mxu0 0
    %816 = vmatpush1.bf16.msra.mxu0 %v232
    %817 = vmatprep.subr.bf16.mxu0 0
    %818 = vmatpush1.bf16.msra.mxu0 %v231
    %819 = vmatprep.subr.bf16.mxu0 0
    %820 = vmatpush1.bf16.msra.mxu0 %v230
    %821 = vmatprep.subr.bf16.mxu0 0
    %822 = vmatpush2.bf16.msra.mxu0 %v245
    %823 = vmatprep.subr.bf16.mxu0 0
    %824 = vmatpush2.bf16.msra.mxu0 %v244
    %825 = vmatprep.subr.bf16.mxu0 0
    %826 = vmatpush2.bf16.msra.mxu0 %v243
    %827 = vmatprep.subr.bf16.mxu0 0
    %828 = vmatpush2.bf16.msra.mxu0 %v242
    %829 = vmatprep.subr.bf16.mxu0 0
    %830 = vmatpush2.bf16.msra.mxu0 %v241
    %831 = vmatprep.subr.bf16.mxu0 0
    %832 = vmatpush2.bf16.msra.mxu0 %v240
    %833 = vmatprep.subr.bf16.mxu0 0
    %834 = vmatpush2.bf16.msra.mxu0 %v239
    %835 = vmatprep.subr.bf16.mxu0 0
    %836 = vmatpush2.bf16.msra.mxu0 %v238
    %837 = vmatprep.mubr.bf16.mxu0 %v802
    %838 = vmatmul.mubr.bf16.gmra.mxu0 %v801
    %v839 = vpop.f32.mrf.mxu0
    %v840 = vadd.f32 %v147, %v839
    %v841 = vpop.f32.mrf.mxu0
    %v842 = vpop.f32.mrf.mxu0
    %v843 = vpop.f32.mrf.mxu0
    %844 = vdwg.mxu0
    %v845 = vxor.u32 %v840, 2147483648
    %v846 = vmul.f32 %v845, 1.442695
    %v847 = vpow.pop %v846
    %v848 = vadd.f32 %v847, 1.0
    %v849 = vrcp.pop %v848
    %v850 = vmul.f32 1.0, %v849
    %vm851 = vcmp.gt.f32.partialorder %v850, %v804
    %v852 = vsel %vm851, 1, 0
    %v853 = vcvt.s32.f32 %v852
    %v854 = vpack.c.bf16 %v853, %v853
    %s855 = scalar_lea.vmem [#allocation10], 64
    %v856 = vld [vmem:[%s855] sm:$0xff]
    %v857 = vld [vmem:[%s855 + $0x8] sm:$0xff]
    %858 = vmatprep.subr.bf16.mxu0 %v377
    %859 = vmatpush1.bf16.msra.mxu0 %v376
    %860 = vmatprep.subr.bf16.mxu0 %v375
    %861 = vmatpush1.bf16.msra.mxu0 %v374
    %862 = vmatprep.subr.bf16.mxu0 %v373
    %863 = vmatpush1.bf16.msra.mxu0 %v372
    %864 = vmatprep.subr.bf16.mxu0 %v371
    %865 = vmatpush1.bf16.msra.mxu0 %v370
    %866 = vmatprep.subr.bf16.mxu0 %v369
    %867 = vmatpush1.bf16.msra.mxu0 %v368
    %868 = vmatprep.subr.bf16.mxu0 %v367
    %869 = vmatpush1.bf16.msra.mxu0 %v366
    %870 = vmatprep.subr.bf16.mxu0 %v365
    %871 = vmatpush1.bf16.msra.mxu0 %v364
    %872 = vmatprep.subr.bf16.mxu0 %v363
    %873 = vmatpush1.bf16.msra.mxu0 %v362
    %874 = vmatprep.subr.bf16.mxu0 0
    %875 = vmatpush2.bf16.msra.mxu0 0
    %876 = vmatprep.subr.bf16.mxu0 0
    %877 = vmatpush2.bf16.msra.mxu0 0
    %878 = vmatprep.subr.bf16.mxu0 0
    %879 = vmatpush2.bf16.msra.mxu0 0
    %880 = vmatprep.subr.bf16.mxu0 0
    %881 = vmatpush2.bf16.msra.mxu0 0
    %882 = vmatprep.subr.bf16.mxu0 0
    %883 = vmatpush2.bf16.msra.mxu0 0
    %884 = vmatprep.subr.bf16.mxu0 0
    %885 = vmatpush2.bf16.msra.mxu0 0
    %886 = vmatprep.subr.bf16.mxu0 0
    %887 = vmatpush2.bf16.msra.mxu0 0
    %888 = vmatprep.subr.bf16.mxu0 0
    %889 = vmatpush2.bf16.msra.mxu0 0
    %890 = vmatprep.mubr.bf16.mxu0 0
    %891 = vmatmul.mubr.bf16.gmra.mxu0 %v854
    %v892 = vpop.f32.mrf.mxu0
    %v893 = vadd.f32 %v154, %v892
    %v894 = vpop.f32.mrf.mxu0
    %v895 = vadd.f32 %v158, %v894
    %v896 = vpop.f32.mrf.mxu0
    %v897 = vpop.f32.mrf.mxu0
    %898 = vdwg.mxu0
    %v899 = vxor.u32 %v893, 2147483648
    %v900 = vxor.u32 %v895, 2147483648
    %v901 = vmul.f32 %v899, 1.442695
    %v902 = vpow.pop %v901
    %v903 = vmul.f32 %v900, 1.442695
    %v904 = vpow.pop %v903
    %v905 = vadd.f32 %v902, 1.0
    %v906 = vadd.f32 %v904, 1.0
    %v907 = vrcp.pop %v905
    %v908 = vmul.f32 1.0, %v907
    %v909 = vrcp.pop %v906
    %v910 = vmul.f32 1.0, %v909
    %vm911 = vcmp.gt.f32.partialorder %v908, %v856
    %vm912 = vcmp.gt.f32.partialorder %v910, %v857
    %v913 = vsel %vm911, 1, 0
    %v914 = vsel %vm912, 1, 0
    %v915 = vcvt.s32.f32 %v913
    %v916 = vcvt.s32.f32 %v914
    %v917 = vpack.c.bf16 %v915, %v915
    %v918 = vpack.c.bf16 %v916, %v916
    %v919 = vunpack.c.l.bf16 %v917
    %v920 = vunpack.c.l.bf16 %v918
    %921 = vst [vmem:[#allocation11] sm:$0xff] %v919
    %922 = vst [vmem:[#allocation11 + $0x8] sm:$0xff] %v920
    // Predicated region
    $region50: #{tpu_custom_call.1} parent=1 // pred_check
      _
    $region51: #{tpu_custom_call.1} parent=1 // pred_check_branch
      %924 = sbr.rel (0) target = $region53
    $region52: #{tpu_custom_call.1} parent=1 // pred_region
      %s926 = ssub.s32 256, 256
      %927 = vsyncadd [#allocation4], %s926
      %s929 = sshll.u32 [#allocation11], 4
      %s930 = int_to_ptr.vmem [resolvable:$true] %s929
      %932 = dma.vmem_to_hbm [thread:$0]  %s930, 256, %s7, [#allocation4]
    $region53: #{tpu_custom_call.1} parent=1 // pred_fallthru
      _
    // Predicated region
    $region54: #{tpu_custom_call.1} parent=1 // pred_check
      _
    $region55: #{tpu_custom_call.1} parent=1 // pred_check_branch
      %934 = sbr.rel (0) target = $region57
    $region56: #{tpu_custom_call.1} parent=1 // pred_region
      %935 = dma.done [#allocation4], 256
    $region57: #{tpu_custom_call.1} parent=1 // pred_fallthru
      _
    %936 = vsyncpa [#allocation3], 1
    %937 = vsyncpa [#allocation6], 1
    %938 = vsyncpa [#allocation9], 1
    %939 = vsyncpa [#allocation4], 1

</llo_original>
